<compile_context>
chip_gen: v7x
topology: tpu7x:2x2x1
jax: 0.10.0
libtpu: 0.0.40
codegen_flags: <defaults>
</compile_context>

<pallas_src>
import functools

import jax
import jax.numpy as jnp
from jax.experimental import pallas as pl
from jax.experimental.pallas import tpu as pltpu


def _round_up(n, m):
    return ((n + m - 1) // m) * m


def _dueling_kernel(action_size, batch_size, state_size,
                    x_ref, w_ref, b_ref, q_ref, psum_ref):
    """One batch tile: 4 fused matmuls -> q_raw and masked per-tile adv sum."""
    a = action_size
    tb = q_ref.shape[0]
    tile = pl.program_id(0)
    wdt = w_ref.dtype                         # bf16 weights, f32 accumulation

    x = x_ref[...]                            # (tb, S) f32
    # feature_layer: Linear -> ReLU -> Linear -> ReLU
    w0 = w_ref[0, 0:state_size, :]            # (S, P), padded cols are zero
    h = jnp.maximum(
        jnp.dot(x.astype(wdt), w0, preferred_element_type=jnp.float32)
        + b_ref[0], 0.0)
    h = jnp.maximum(
        jnp.dot(h.astype(wdt), w_ref[1], preferred_element_type=jnp.float32)
        + b_ref[1], 0.0)
    # merged head hidden layer: cols [0:H) advantage-hidden, [H:2H) value-hidden
    h = jnp.maximum(
        jnp.dot(h.astype(wdt), w_ref[2], preferred_element_type=jnp.float32)
        + b_ref[2], 0.0)
    # merged head output layer (block diagonal): cols [0:A) adv, col A value, rest 0
    z = (jnp.dot(h.astype(wdt), w_ref[3], preferred_element_type=jnp.float32)
         + b_ref[3])                          # (tb, P)

    adv = z[:, 0:a]                           # (tb, A)
    val = z[:, a:a + 1]                       # (tb, 1)
    q_ref[...] = adv + val                    # padded rows sliced off in the wrapper

    # Lane-dense per-tile partial sum of advantages (mask out padded batch rows,
    # the value column, and padded lanes).  The cross-lane reduction happens
    # once in the XLA epilogue.
    row = jax.lax.broadcasted_iota(jnp.int32, z.shape, 0) + tile * tb
    lane = jax.lax.broadcasted_iota(jnp.int32, z.shape, 1)
    keep = jnp.logical_and(row < batch_size, lane < a)
    psum_ref[...] = jnp.sum(jnp.where(keep, z, 0.0), axis=0, keepdims=True)[None]


@functools.partial(jax.jit, static_argnames=("action_size", "block_b"))
def dueling_dqn_forward(x, w_slab, b_slab, action_size, block_b=512):
    """Fused Dueling-DQN forward on packed slabs; mean-subtract epilogue in XLA."""
    B, S = x.shape
    P = w_slab.shape[-1]

    block_b = _round_up(block_b, 8)
    tb = min(block_b, _round_up(B, 8))        # sublane-aligned batch tile
    B_pad = _round_up(B, tb)
    n_tiles = B_pad // tb
    if B_pad != B:
        x = jnp.pad(x, ((0, B_pad - B), (0, 0)))

    kernel = functools.partial(_dueling_kernel, action_size, B, S)
    q_raw, psums = pl.pallas_call(
        kernel,
        out_shape=(
            jax.ShapeDtypeStruct((B_pad, action_size), jnp.float32),
            jax.ShapeDtypeStruct((n_tiles, 1, P), jnp.float32),
        ),
        grid=(n_tiles,),
        in_specs=[
            pl.BlockSpec((tb, S), lambda t: (t, 0)),        # x: tiled over batch
            pl.BlockSpec((4, P, P), lambda t: (0, 0, 0)),   # weight slab: resident
            pl.BlockSpec((4, 1, P), lambda t: (0, 0, 0)),   # bias slab: resident
        ],
        out_specs=(
            pl.BlockSpec((tb, action_size), lambda t: (t, 0)),
            pl.BlockSpec((1, 1, P), lambda t: (t, 0, 0)),
        ),
        compiler_params=pltpu.CompilerParams(
            # Tiles are fully independent (per-tile adv sums); safe for megacore.
            dimension_semantics=("parallel",),
        ),
    )(x, w_slab, b_slab)

    # Global scalar mean over the true (B, A) advantages, exactly like the
    # PyTorch `advantages.mean()`, then subtract — a trivial fused epilogue.
    mean = jnp.sum(psums) / (B * action_size)
    return q_raw[:B] - mean


def init_params(key, state_size, action_size, hidden_size):
    """Deterministic init mimicking torch.nn.Linear (uniform +/- 1/sqrt(fan_in))."""
    def linear(key, fan_in, fan_out):
        kw, kb = jax.random.split(key)
        bound = 1.0 / jnp.sqrt(fan_in)
        w = jax.random.uniform(kw, (fan_in, fan_out), jnp.float32, -bound, bound)
        b = jax.random.uniform(kb, (1, fan_out), jnp.float32, -bound, bound)
        return w, b

    keys = jax.random.split(key, 6)
    w1, b1 = linear(keys[0], state_size, hidden_size)
    w2, b2 = linear(keys[1], hidden_size, hidden_size)
    wa1, ba1 = linear(keys[2], hidden_size, hidden_size)
    wa2, ba2 = linear(keys[3], hidden_size, action_size)
    wv1, bv1 = linear(keys[4], hidden_size, hidden_size)
    wv2, bv2 = linear(keys[5], hidden_size, 1)
    return dict(w1=w1, b1=b1, w2=w2, b2=b2,
                wa1=wa1, ba1=ba1, wa2=wa2, ba2=ba2,
                wv1=wv1, bv1=bv1, wv2=wv2, bv2=bv2)


def pack_params(params, state_size, action_size, hidden_size,
                weight_dtype=jnp.bfloat16):
    """Pack the 12 per-layer tensors into one bf16 weight slab + one f32 bias slab.

    Layer 2 concatenates the advantage/value hidden layers side by side; layer 3
    is block-diagonal [[wa2, 0], [0, wv2]] so both heads come out of one matmul.
    Zero padding keeps padded lanes mathematically inert; P is lane-padded to a
    multiple of 128 so every layer is lane-dense on the MXU/VPU.
    """
    H, S, A = hidden_size, state_size, action_size
    P = max(2 * H, S, A + 1)
    P = ((P + 127) // 128) * 128                # lane-align packed dims

    w = jnp.zeros((4, P, P), jnp.float32)
    b = jnp.zeros((4, 1, P), jnp.float32)
    # feature layer 1
    w = w.at[0, :S, :H].set(params["w1"])
    b = b.at[0, 0, :H].set(params["b1"].reshape(-1))
    # feature layer 2
    w = w.at[1, :H, :H].set(params["w2"])
    b = b.at[1, 0, :H].set(params["b2"].reshape(-1))
    # merged head hidden layer: [adv_hidden | value_hidden]
    w = w.at[2, :H, :H].set(params["wa1"])
    w = w.at[2, :H, H:2 * H].set(params["wv1"])
    b = b.at[2, 0, :H].set(params["ba1"].reshape(-1))
    b = b.at[2, 0, H:2 * H].set(params["bv1"].reshape(-1))
    # merged head output layer: block diagonal
    w = w.at[3, :H, :A].set(params["wa2"])
    w = w.at[3, H:2 * H, A:A + 1].set(params["wv2"])
    b = b.at[3, 0, :A].set(params["ba2"].reshape(-1))
    b = b.at[3, 0, A:A + 1].set(params["bv2"].reshape(-1))
    return w.astype(weight_dtype), b


def reference_forward_f32(x, p):
    """Pure-JAX f32 reference matching the PyTorch module exactly."""
    h1 = jax.nn.relu(x @ p["w1"] + p["b1"])
    feat = jax.nn.relu(h1 @ p["w2"] + p["b2"])
    adv = jax.nn.relu(feat @ p["wa1"] + p["ba1"]) @ p["wa2"] + p["ba2"]
    val = jax.nn.relu(feat @ p["wv1"] + p["bv1"]) @ p["wv2"] + p["bv2"]
    return val + (adv - jnp.mean(adv))   # NOTE: global scalar mean, per the torch code


def reference_forward_quantized(x, p, weight_dtype=jnp.bfloat16):
    """Reference mirroring the kernel's bf16-weight / f32-accumulate arithmetic."""
    def lin(h, w, b):
        return jnp.dot(h.astype(weight_dtype), w.astype(weight_dtype),
                       preferred_element_type=jnp.float32) + b
    h1 = jax.nn.relu(lin(x, p["w1"], p["b1"]))
    feat = jax.nn.relu(lin(h1, p["w2"], p["b2"]))
    adv = lin(jax.nn.relu(lin(feat, p["wa1"], p["ba1"])), p["wa2"], p["ba2"])
    val = lin(jax.nn.relu(lin(feat, p["wv1"], p["bv1"])), p["wv2"], p["bv2"])
    return val + (adv - jnp.mean(adv))


if __name__ == "__main__":
    state_size, action_size, hidden_size = 16, 8, 32
    batch = 200          # ragged on purpose: exercises tail padding + row masking

    key = jax.random.PRNGKey(0)
    k_params, k_x = jax.random.split(key)
    params = init_params(k_params, state_size, action_size, hidden_size)
    x = jax.random.normal(k_x, (batch, state_size), jnp.float32)

    w_slab, b_slab = pack_params(params, state_size, action_size, hidden_size)

    # Multi-tile path (2 tiles of 128, last one partially padded).
    out = dueling_dqn_forward(x, w_slab, b_slab, action_size, block_b=128)
    out = jax.block_until_ready(out)
    # Default large-tile path (whole batch in one tile).
    out_one_tile = dueling_dqn_forward(x, w_slab, b_slab, action_size)
    out_one_tile = jax.block_until_ready(out_one_tile)

    ref_q = reference_forward_quantized(x, params)
    ref_f32 = reference_forward_f32(x, params)

    assert out.shape == (batch, action_size)
    err_q = float(jnp.max(jnp.abs(out - ref_q)))
    assert jnp.allclose(out, ref_q, atol=2e-3, rtol=1e-3), err_q
    err_f = float(jnp.max(jnp.abs(out - ref_f32)))
    assert jnp.allclose(out, ref_f32, atol=5e-2, rtol=5e-2), err_f
    err_t = float(jnp.max(jnp.abs(out - out_one_tile)))
    assert jnp.allclose(out, out_one_tile, atol=1e-5, rtol=1e-5), err_t

    print("KERNEL_OK")
</pallas_src>

<mosaic_0001>
module attributes {stable_mosaic.version = 11 : i64} {
  func.func @_dueling_kernel(%arg0: i32, %arg1: memref<128x16xf32, #tpu.memory_space<vmem>>, %arg2: memref<4x128x128xbf16, #tpu.memory_space<vmem>>, %arg3: memref<4x1x128xf32, #tpu.memory_space<vmem>>, %arg4: memref<128x8xf32, #tpu.memory_space<vmem>>, %arg5: memref<1x1x128xf32, #tpu.memory_space<vmem>>) attributes {dimension_semantics = [#tpu.dimension_semantics<parallel>], iteration_bounds = array<i64: 2>, scalar_prefetch = 0 : i64, scratch_operands = 0 : i64, tpu.core_type = #tpu.core_type<tc>, window_params = [{transform_indices = @transform_0, window_bounds = array<i64: 128, 16>}, {pipeline_mode = #tpu.pipeline_mode<synchronous>, transform_indices = @transform_1, window_bounds = array<i64: 4, 128, 128>}, {pipeline_mode = #tpu.pipeline_mode<synchronous>, transform_indices = @transform_2, window_bounds = array<i64: 4, 1, 128>}, {transform_indices = @transform_3, window_bounds = array<i64: 128, 8>}, {transform_indices = @transform_4, window_bounds = array<i64: 1, 1, 128>}]} {
    %c0 = arith.constant 0 : index
    %c0_0 = arith.constant 0 : index
    %0 = vector.load %arg1[%c0, %c0_0] : memref<128x16xf32, #tpu.memory_space<vmem>>, vector<128x16xf32>
    %c0_1 = arith.constant 0 : index
    %c0_2 = arith.constant 0 : index
    %c0_3 = arith.constant 0 : index
    %1 = vector.load %arg2[%c0_1, %c0_2, %c0_3] : memref<4x128x128xbf16, #tpu.memory_space<vmem>>, vector<1x16x128xbf16>
    %2 = vector.shape_cast %1 : vector<1x16x128xbf16> to vector<16x128xbf16>
    %3 = arith.truncf %0 : vector<128x16xf32> to vector<128x16xbf16>
    %cst = arith.constant dense<0.000000e+00> : vector<128x128xf32>
    %4 = tpu.matmul %3, %2, %cst {dimension_numbers = #tpu.dot_dimension_numbers<[1], [0], [0], [1], [0, 0, 1, 1], [], []>} : vector<128x16xbf16>, vector<16x128xbf16>, vector<128x128xf32> -> vector<128x128xf32>
    %c0_4 = arith.constant 0 : index
    %c0_5 = arith.constant 0 : index
    %c0_6 = arith.constant 0 : index
    %5 = vector.load %arg3[%c0_4, %c0_5, %c0_6] : memref<4x1x128xf32, #tpu.memory_space<vmem>>, vector<1x1x128xf32>
    %6 = vector.shape_cast %5 : vector<1x1x128xf32> to vector<1x128xf32>
    %7 = vector.broadcast %6 : vector<1x128xf32> to vector<128x128xf32>
    %8 = arith.addf %4, %7 : vector<128x128xf32>
    %cst_7 = arith.constant 0.000000e+00 : f32
    %9 = vector.broadcast %cst_7 : f32 to vector<128x128xf32>
    %10 = arith.maximumf %8, %9 : vector<128x128xf32>
    %11 = arith.truncf %10 : vector<128x128xf32> to vector<128x128xbf16>
    %c1 = arith.constant 1 : index
    %c0_8 = arith.constant 0 : index
    %c0_9 = arith.constant 0 : index
    %12 = vector.load %arg2[%c1, %c0_8, %c0_9] : memref<4x128x128xbf16, #tpu.memory_space<vmem>>, vector<1x128x128xbf16>
    %13 = vector.shape_cast %12 : vector<1x128x128xbf16> to vector<128x128xbf16>
    %cst_10 = arith.constant dense<0.000000e+00> : vector<128x128xf32>
    %14 = tpu.matmul %11, %13, %cst_10 {dimension_numbers = #tpu.dot_dimension_numbers<[1], [0], [0], [1], [0, 0, 1, 1], [], []>} : vector<128x128xbf16>, vector<128x128xbf16>, vector<128x128xf32> -> vector<128x128xf32>
    %c1_11 = arith.constant 1 : index
    %c0_12 = arith.constant 0 : index
    %c0_13 = arith.constant 0 : index
    %15 = vector.load %arg3[%c1_11, %c0_12, %c0_13] : memref<4x1x128xf32, #tpu.memory_space<vmem>>, vector<1x1x128xf32>
    %16 = vector.shape_cast %15 : vector<1x1x128xf32> to vector<1x128xf32>
    %17 = vector.broadcast %16 : vector<1x128xf32> to vector<128x128xf32>
    %18 = arith.addf %14, %17 : vector<128x128xf32>
    %cst_14 = arith.constant 0.000000e+00 : f32
    %19 = vector.broadcast %cst_14 : f32 to vector<128x128xf32>
    %20 = arith.maximumf %18, %19 : vector<128x128xf32>
    %21 = arith.truncf %20 : vector<128x128xf32> to vector<128x128xbf16>
    %c2 = arith.constant 2 : index
    %c0_15 = arith.constant 0 : index
    %c0_16 = arith.constant 0 : index
    %22 = vector.load %arg2[%c2, %c0_15, %c0_16] : memref<4x128x128xbf16, #tpu.memory_space<vmem>>, vector<1x128x128xbf16>
    %23 = vector.shape_cast %22 : vector<1x128x128xbf16> to vector<128x128xbf16>
    %cst_17 = arith.constant dense<0.000000e+00> : vector<128x128xf32>
    %24 = tpu.matmul %21, %23, %cst_17 {dimension_numbers = #tpu.dot_dimension_numbers<[1], [0], [0], [1], [0, 0, 1, 1], [], []>} : vector<128x128xbf16>, vector<128x128xbf16>, vector<128x128xf32> -> vector<128x128xf32>
    %c2_18 = arith.constant 2 : index
    %c0_19 = arith.constant 0 : index
    %c0_20 = arith.constant 0 : index
    %25 = vector.load %arg3[%c2_18, %c0_19, %c0_20] : memref<4x1x128xf32, #tpu.memory_space<vmem>>, vector<1x1x128xf32>
    %26 = vector.shape_cast %25 : vector<1x1x128xf32> to vector<1x128xf32>
    %27 = vector.broadcast %26 : vector<1x128xf32> to vector<128x128xf32>
    %28 = arith.addf %24, %27 : vector<128x128xf32>
    %cst_21 = arith.constant 0.000000e+00 : f32
    %29 = vector.broadcast %cst_21 : f32 to vector<128x128xf32>
    %30 = arith.maximumf %28, %29 : vector<128x128xf32>
    %31 = arith.truncf %30 : vector<128x128xf32> to vector<128x128xbf16>
    %c3 = arith.constant 3 : index
    %c0_22 = arith.constant 0 : index
    %c0_23 = arith.constant 0 : index
    %32 = vector.load %arg2[%c3, %c0_22, %c0_23] : memref<4x128x128xbf16, #tpu.memory_space<vmem>>, vector<1x128x128xbf16>
    %33 = vector.shape_cast %32 : vector<1x128x128xbf16> to vector<128x128xbf16>
    %cst_24 = arith.constant dense<0.000000e+00> : vector<128x128xf32>
    %34 = tpu.matmul %31, %33, %cst_24 {dimension_numbers = #tpu.dot_dimension_numbers<[1], [0], [0], [1], [0, 0, 1, 1], [], []>} : vector<128x128xbf16>, vector<128x128xbf16>, vector<128x128xf32> -> vector<128x128xf32>
    %c3_25 = arith.constant 3 : index
    %c0_26 = arith.constant 0 : index
    %c0_27 = arith.constant 0 : index
    %35 = vector.load %arg3[%c3_25, %c0_26, %c0_27] : memref<4x1x128xf32, #tpu.memory_space<vmem>>, vector<1x1x128xf32>
    %36 = vector.shape_cast %35 : vector<1x1x128xf32> to vector<1x128xf32>
    %37 = vector.broadcast %36 : vector<1x128xf32> to vector<128x128xf32>
    %38 = arith.addf %34, %37 : vector<128x128xf32>
    %39 = vector.extract_strided_slice %38 {offsets = [0, 0], sizes = [128, 8], strides = [1, 1]} : vector<128x128xf32> to vector<128x8xf32>
    %40 = vector.extract_strided_slice %38 {offsets = [0, 8], sizes = [128, 1], strides = [1, 1]} : vector<128x128xf32> to vector<128x1xf32>
    %41 = vector.broadcast %40 : vector<128x1xf32> to vector<128x8xf32>
    %42 = arith.addf %39, %41 : vector<128x8xf32>
    %c0_28 = arith.constant 0 : index
    %c0_29 = arith.constant 0 : index
    %43 = vector.load %arg4[%c0_28, %c0_29] : memref<128x8xf32, #tpu.memory_space<vmem>>, vector<128x8xf32>
    tpu.vector_store %arg4[%c0_28, %c0_29], %42 {strides = array<i32>} : memref<128x8xf32, #tpu.memory_space<vmem>>, vector<128x8xf32>,
    %44 = tpu.iota {dimensions = array<i32: 0>} : vector<128x128xi32>
    %c128_i32 = arith.constant 128 : i32
    %45 = arith.muli %arg0, %c128_i32 : i32
    %46 = vector.broadcast %45 : i32 to vector<128x128xi32>
    %47 = arith.addi %44, %46 : vector<128x128xi32>
    %48 = tpu.iota {dimensions = array<i32: 1>} : vector<128x128xi32>
    %c200_i32 = arith.constant 200 : i32
    %49 = vector.broadcast %c200_i32 : i32 to vector<128x128xi32>
    %50 = arith.cmpi slt, %47, %49 : vector<128x128xi32>
    %c8_i32 = arith.constant 8 : i32
    %51 = vector.broadcast %c8_i32 : i32 to vector<128x128xi32>
    %52 = arith.cmpi slt, %48, %51 : vector<128x128xi32>
    %53 = arith.andi %50, %52 : vector<128x128xi1>
    %cst_30 = arith.constant 0.000000e+00 : f32
    %54 = vector.broadcast %cst_30 : f32 to vector<128x128xf32>
    %55 = arith.select %53, %38, %54 : vector<128x128xi1>, vector<128x128xf32>
    %cst_31 = arith.constant dense<0.000000e+00> : vector<128xf32>
    %56 = vector.multi_reduction <add>, %55, %cst_31 [0] : vector<128x128xf32> to vector<128xf32>
    %57 = vector.shape_cast %56 : vector<128xf32> to vector<1x128xf32>
    %58 = vector.shape_cast %57 : vector<1x128xf32> to vector<1x1x128xf32>
    %c0_32 = arith.constant 0 : index
    %c0_33 = arith.constant 0 : index
    %c0_34 = arith.constant 0 : index
    %59 = vector.load %arg5[%c0_32, %c0_33, %c0_34] : memref<1x1x128xf32, #tpu.memory_space<vmem>>, vector<1x1x128xf32>
    tpu.vector_store %arg5[%c0_32, %c0_33, %c0_34], %58 {strides = array<i32>} : memref<1x1x128xf32, #tpu.memory_space<vmem>>, vector<1x1x128xf32>,
    return
  }
  func.func @transform_0(%arg0: i32) -> (i32, i32) {
    %c0_i32 = arith.constant 0 : i32
    %c0_i32_0 = arith.constant 0 : i32
    return %arg0, %c0_i32 : i32, i32
  }
  func.func @transform_1(%arg0: i32) -> (i32, i32, i32) {
    %c0_i32 = arith.constant 0 : i32
    %c0_i32_0 = arith.constant 0 : i32
    %c0_i32_1 = arith.constant 0 : i32
    %c0_i32_2 = arith.constant 0 : i32
    return %c0_i32, %c0_i32_0, %c0_i32_1 : i32, i32, i32
  }
  func.func @transform_2(%arg0: i32) -> (i32, i32, i32) {
    %c0_i32 = arith.constant 0 : i32
    %c0_i32_0 = arith.constant 0 : i32
    %c0_i32_1 = arith.constant 0 : i32
    %c0_i32_2 = arith.constant 0 : i32
    return %c0_i32, %c0_i32_0, %c0_i32_1 : i32, i32, i32
  }
  func.func @transform_3(%arg0: i32) -> (i32, i32) {
    %c0_i32 = arith.constant 0 : i32
    %c0_i32_0 = arith.constant 0 : i32
    return %arg0, %c0_i32 : i32, i32
  }
  func.func @transform_4(%arg0: i32) -> (i32, i32, i32) {
    %c0_i32 = arith.constant 0 : i32
    %c0_i32_0 = arith.constant 0 : i32
    %c0_i32_1 = arith.constant 0 : i32
    return %arg0, %c0_i32, %c0_i32_0 : i32, i32, i32
  }
}

</mosaic_0001>

<llo_original>
// kernel: dueling_dqn_forward.1
$region0: #{dueling_dqn_forward.1}
  #allocation0 [shape = 'u32[]', space=smem, size = 0x4, offset = 0x4, fixed_abs, tag = 'smem constant byte address 0x4 - core index']
  #allocation1 [shape = 'u32[144,128]{1,0:T(1,128)}', space=vmem, size = 0x12000, scoped, tag = 'internal scratch']
  %s0 = inlined_call_operand.vmem [shape: f32[256,16], index: 0, kind: input, shape index: {}]
  %s1 = inlined_call_operand.vmem [shape: bf16[4,128,128], index: 1, kind: input, shape index: {}]
  %s2 = inlined_call_operand.vmem [shape: f32[4,1,128], index: 2, kind: input, shape index: {}]
  %s3 = inlined_call_operand.vmem [shape: f32[256,8], index: 3, kind: output, shape index: {0}]
  %s4 = inlined_call_operand.vmem [shape: f32[2,1,128], index: 4, kind: output, shape index: {1}]
  %5 = xla_tuple %s3, %s4
  %s6 = sld [smem:[#allocation0]]
  $region53: #{dueling_dqn_forward.1} parent=0
    _
  %s8 = ssub.s32 1, %s6
  %s9 = scalar_select 0, %s8, %s6
  loop: start=0, step=1, limit=4
  $region2: #{dueling_dqn_forward.1} parent=0 // loop_pre_header
    _
  $region3: #{dueling_dqn_forward.1} parent=0 // loop_header
    %s11 = sphi 0, %s15
    %p12 = scmp.ge.s32.totalorder %s11, 4
    %s21 = sphi 0, %s23
    %s24 = sphi 0, %s21
    %s25 = sphi 0, %s24
    %s41 = sphi 0, %s25
    %s45 = sphi 0, %s45
    %s47 = sphi 0, %s45
    %s48 = sphi 0, %s47
    %s62 = sphi 0, %s48
    %s66 = sphi 0, %s66
    %s68 = sphi 0, %s66
    %s69 = sphi 0, %s68
    %s83 = sphi 0, %s69
    %s89 = sphi 0, %s91
    %s92 = sphi 0, %s89
    %s93 = sphi 0, %s92
    %s109 = sphi 0, %s93
    %s115 = sphi 0, %s117
    %s118 = sphi 0, %s115
    %s119 = sphi 0, %s118
    %s135 = sphi 0, %s119
  $region4: #{dueling_dqn_forward.1} parent=0 // loop_header_branch
    %14 = sbr.rel (%p12) target = $region8
  $region5: #{dueling_dqn_forward.1} parent=0 // loop_body
    %s16 = ssub.s32 %s11, 1
    %s17 = ssub.s32 %s11, 2
    %s18 = sadd.s32 %s11, 1
    %s19 = ssub.s32 %s11, %s18
    %p20 = scmp.eq.s32.totalorder %s19, 0
    %s22 = sadd.s32 %s21, 1
    %s23 = scalar_select %p20, %s21, %s22
    %p26 = pneg %p20
    %p27 = scmp.eq.s32.totalorder %s11, 1
    %p28 = por %p26, %p27
    %p29 = scmp.ne.s32.totalorder %s21, %s24
    %p30 = scmp.eq.s32.totalorder %s11, 0
    %p31 = por %p29, %p30
    %p32 = scmp.ne.s32.totalorder %s21, %s24
    %p33 = scmp.eq.s32.totalorder %s16, 1
    %p34 = por %p32, %p33
    %p35 = scmp.ne.s32.totalorder %s24, %s25
    %p36 = scmp.eq.s32.totalorder %s16, 0
    %p37 = por %p35, %p36
    %p38 = scmp.ne.s32.totalorder %s24, %s25
    %p39 = scmp.eq.s32.totalorder %s17, 1
    %p40 = por %p38, %p39
    %p42 = scmp.ne.s32.totalorder %s25, %s41
    %p43 = scmp.eq.s32.totalorder %s17, 0
    %p44 = por %p42, %p43
    %s46 = sadd.s32 %s45, 1
    %p49 = scmp.eq.s32.totalorder %s11, 1
    %p50 = scmp.ne.s32.totalorder %s45, %s47
    %p51 = scmp.eq.s32.totalorder %s11, 0
    %p52 = por %p50, %p51
    %p53 = scmp.ne.s32.totalorder %s45, %s47
    %p54 = scmp.eq.s32.totalorder %s16, 1
    %p55 = por %p53, %p54
    %p56 = scmp.ne.s32.totalorder %s47, %s48
    %p57 = scmp.eq.s32.totalorder %s16, 0
    %p58 = por %p56, %p57
    %p59 = scmp.ne.s32.totalorder %s47, %s48
    %p60 = scmp.eq.s32.totalorder %s17, 1
    %p61 = por %p59, %p60
    %p63 = scmp.ne.s32.totalorder %s48, %s62
    %p64 = scmp.eq.s32.totalorder %s17, 0
    %p65 = por %p63, %p64
    %s67 = sadd.s32 %s66, 1
    %p70 = scmp.eq.s32.totalorder %s11, 1
    %p71 = scmp.ne.s32.totalorder %s66, %s68
    %p72 = scmp.eq.s32.totalorder %s11, 0
    %p73 = por %p71, %p72
    %p74 = scmp.ne.s32.totalorder %s66, %s68
    %p75 = scmp.eq.s32.totalorder %s16, 1
    %p76 = por %p74, %p75
    %p77 = scmp.ne.s32.totalorder %s68, %s69
    %p78 = scmp.eq.s32.totalorder %s16, 0
    %p79 = por %p77, %p78
    %p80 = scmp.ne.s32.totalorder %s68, %s69
    %p81 = scmp.eq.s32.totalorder %s17, 1
    %p82 = por %p80, %p81
    %p84 = scmp.ne.s32.totalorder %s69, %s83
    %p85 = scmp.eq.s32.totalorder %s17, 0
    %p86 = por %p84, %p85
    %s87 = ssub.s32 %s11, %s18
    %p88 = scmp.eq.s32.totalorder %s87, 0
    %s90 = sadd.s32 %s89, 1
    %s91 = scalar_select %p88, %s89, %s90
    %p94 = pneg %p88
    %p95 = scmp.eq.s32.totalorder %s11, 1
    %p96 = por %p94, %p95
    %p97 = scmp.ne.s32.totalorder %s89, %s92
    %p98 = scmp.eq.s32.totalorder %s11, 0
    %p99 = por %p97, %p98
    %p100 = scmp.ne.s32.totalorder %s89, %s92
    %p101 = scmp.eq.s32.totalorder %s16, 1
    %p102 = por %p100, %p101
    %p103 = scmp.ne.s32.totalorder %s92, %s93
    %p104 = scmp.eq.s32.totalorder %s16, 0
    %p105 = por %p103, %p104
    %p106 = scmp.ne.s32.totalorder %s92, %s93
    %p107 = scmp.eq.s32.totalorder %s17, 1
    %p108 = por %p106, %p107
    %p110 = scmp.ne.s32.totalorder %s93, %s109
    %p111 = scmp.eq.s32.totalorder %s17, 0
    %p112 = por %p110, %p111
    %s113 = ssub.s32 %s11, %s18
    %p114 = scmp.eq.s32.totalorder %s113, 0
    %s116 = sadd.s32 %s115, 1
    %s117 = scalar_select %p114, %s115, %s116
    %p120 = pneg %p114
    %p121 = scmp.eq.s32.totalorder %s11, 1
    %p122 = por %p120, %p121
    %p123 = scmp.ne.s32.totalorder %s115, %s118
    %p124 = scmp.eq.s32.totalorder %s11, 0
    %p125 = por %p123, %p124
    %p126 = scmp.ne.s32.totalorder %s115, %s118
    %p127 = scmp.eq.s32.totalorder %s16, 1
    %p128 = por %p126, %p127
    %p129 = scmp.ne.s32.totalorder %s118, %s119
    %p130 = scmp.eq.s32.totalorder %s16, 0
    %p131 = por %p129, %p130
    %p132 = scmp.ne.s32.totalorder %s118, %s119
    %p133 = scmp.eq.s32.totalorder %s17, 1
    %p134 = por %p132, %p133
    %p136 = scmp.ne.s32.totalorder %s119, %s135
    %p137 = scmp.eq.s32.totalorder %s17, 0
    %p138 = por %p136, %p137
    %p139 = scmp.le.s32.totalorder 1, %s11
    %p140 = scmp.lt.s32.totalorder %s11, 3
    %p141 = pnand %p139, %p140
    %p142 = pneg %p141
    // Predicated region
    $region9: #{dueling_dqn_forward.1} parent=5 // pred_check
      _
    $region10: #{dueling_dqn_forward.1} parent=5 // pred_check_branch
      %144 = sbr.rel (%p141) target = $region12
    $region11: #{dueling_dqn_forward.1} parent=5 // pred_region
      %s145 = ssub.s32 %s11, 1
      // Predicated region
      $region13: #{dueling_dqn_forward.1} parent=11 // pred_check
        %p146 = pneg %p58
      $region14: #{dueling_dqn_forward.1} parent=11 // pred_check_branch
        %148 = sbr.rel (%p146) target = $region16
      $region15: #{dueling_dqn_forward.1} parent=11 // pred_region
        _
      $region16: #{dueling_dqn_forward.1} parent=11 // pred_fallthru
        _
      // Predicated region
      $region17: #{dueling_dqn_forward.1} parent=11 // pred_check
        %p149 = pneg %p79
      $region18: #{dueling_dqn_forward.1} parent=11 // pred_check_branch
        %151 = sbr.rel (%p149) target = $region20
      $region19: #{dueling_dqn_forward.1} parent=11 // pred_region
        _
      $region20: #{dueling_dqn_forward.1} parent=11 // pred_fallthru
        _
    $region12: #{dueling_dqn_forward.1} parent=5 // pred_fallthru
      _
    %p152 = scmp.lt.s32.totalorder %s11, 2
    // Predicated region
    $region21: #{dueling_dqn_forward.1} parent=5 // pred_check
      %p153 = pneg %p152
    $region22: #{dueling_dqn_forward.1} parent=5 // pred_check_branch
      %155 = sbr.rel (%p153) target = $region24
    $region23: #{dueling_dqn_forward.1} parent=5 // pred_region
      // Predicated region
      $region25: #{dueling_dqn_forward.1} parent=23 // pred_check
        %p156 = pneg %p31
      $region26: #{dueling_dqn_forward.1} parent=23 // pred_check_branch
        %158 = sbr.rel (%p156) target = $region28
      $region27: #{dueling_dqn_forward.1} parent=23 // pred_region
        %s159 = smul.u32 16, %s11
        %p160 = scmp.lt.s32.totalorder %s159, 31
        %s161 = scalar_select %p160, %s159, 31
        %s162 = smul.addr %s161, 8
        %s163 = scalar_lea.vmem %s0, %s162
        %s164 = smul.u32 16, %s11
      $region28: #{dueling_dqn_forward.1} parent=23 // pred_fallthru
        _
    $region24: #{dueling_dqn_forward.1} parent=5 // pred_fallthru
      _
    %p165 = scmp.le.s32.totalorder 1, %s11
    %p166 = scmp.lt.s32.totalorder %s11, 3
    %p167 = pnand %p165, %p166
    %p168 = pneg %p167
    // Predicated region
    $region29: #{dueling_dqn_forward.1} parent=5 // pred_check
      _
    $region30: #{dueling_dqn_forward.1} parent=5 // pred_check_branch
      %170 = sbr.rel (%p167) target = $region32
    $region31: #{dueling_dqn_forward.1} parent=5 // pred_region
      %s171 = ssub.s32 %s11, 1
      %s172 = smul.u32 16, %s16
      %p173 = scmp.lt.s32.totalorder %s172, 31
      %s174 = scalar_select %p173, %s172, 31
      %s175 = smul.addr %s174, 8
      %s176 = scalar_lea.vmem %s0, %s175
      %p177 = pneg %p37
      %p178 = pneg %p34
      %p179 = pneg %p58
      %p180 = pneg %p55
      %p181 = pneg %p79
      %p182 = pneg %p76
      %p183 = pneg %p105
      %p184 = pneg %p102
      %s185 = smul.u32 16, %s16
      %p186 = scmp.lt.s32.totalorder %s185, 31
      %s187 = scalar_select %p186, %s185, 31
      %s188 = smul.addr %s187, 8
      %s189 = scalar_lea.vmem %s3, %s188
      %p190 = pneg %p131
      %p191 = pneg %p128
      %p192 = scmp.lt.s32.totalorder %s16, 1
      %s193 = scalar_select %p192, %s16, 1
      %s194 = scalar_lea.vmem %s4, %s193
      %s195 = smul.u32 16, %s16
      %p196 = scmp.lt.s32.totalorder %s195, 31
      %s197 = scalar_select %p196, %s195, 31
      %s198 = smul.addr %s197, 8
      %s199 = scalar_lea.vmem %s0, %s198
      %s200 = smul.u32 16, %s16
      %s201 = smul.u32 16, %s16
      %p202 = scmp.lt.s32.totalorder %s201, 31
      %s203 = scalar_select %p202, %s201, 31
      %s204 = smul.addr %s203, 8
      %s205 = scalar_lea.vmem %s3, %s204
      %s206 = smul.u32 16, %s16
      %p207 = scmp.lt.s32.totalorder %s16, 1
      %s208 = scalar_select %p207, %s16, 1
      %s209 = scalar_lea.vmem %s4, %s208
      %v211 = vld [vmem:[%s199] sm:$0xff]
      %v212 = vld [vmem:[%s199 + $0x8] sm:$0xff]
      %v213 = vld [vmem:[%s199 + $0x10] sm:$0xff]
      %v214 = vld [vmem:[%s199 + $0x18] sm:$0xff]
      %v215 = vld [vmem:[%s199 + $0x20] sm:$0xff]
      %v216 = vld [vmem:[%s199 + $0x28] sm:$0xff]
      %v217 = vld [vmem:[%s199 + $0x30] sm:$0xff]
      %v218 = vld [vmem:[%s199 + $0x38] sm:$0xff]
      %v219 = vld [vmem:[%s199 + $0x40] sm:$0xff]
      %v220 = vld [vmem:[%s199 + $0x48] sm:$0xff]
      %v221 = vld [vmem:[%s199 + $0x50] sm:$0xff]
      %v222 = vld [vmem:[%s199 + $0x58] sm:$0xff]
      %v223 = vld [vmem:[%s199 + $0x60] sm:$0xff]
      %v224 = vld [vmem:[%s199 + $0x68] sm:$0xff]
      %v225 = vld [vmem:[%s199 + $0x70] sm:$0xff]
      %v226 = vld [vmem:[%s199 + $0x78] sm:$0xff]
      %v227 = vld [vmem:[%s1] sm:$0xf]
      %v228 = vld [vmem:[%s1 + $0x4] sm:$0xf]
      %v229 = vpack.c.bf16 %v212, %v211
      %v230 = vpack.c.bf16 %v214, %v213
      %v231 = vpack.c.bf16 %v216, %v215
      %v232 = vpack.c.bf16 %v218, %v217
      %v233 = vpack.c.bf16 %v220, %v219
      %v234 = vpack.c.bf16 %v222, %v221
      %v235 = vpack.c.bf16 %v224, %v223
      %v236 = vpack.c.bf16 %v226, %v225
      %v237 = vld [vmem:[%s2] sm:$0x1]
      %v239 = vlaneseq
      %v240 = vshrl.u32 %v239, 7
      %v241 = vsub.s32 0, %v240
      %v242 = vrot.slane %v237, %v241
      %v246 = vunpack.c.l.b16 %v227
      %v247 = vunpack.c.l.b16 %v228
      %v248 = vpack.c.b16 %v247, %v246
      %vm250 = vcmask 130048
      %v252 = vsel %vm250, %v229, 0
      %v255 = vsel %vm250, %v230, 0
      %v258 = vsel %vm250, %v231, 0
      %v261 = vsel %vm250, %v232, 0
      %v264 = vsel %vm250, %v233, 0
      %v267 = vsel %vm250, %v234, 0
      %v270 = vsel %vm250, %v235, 0
      %v273 = vsel %vm250, %v236, 0
      %275 = vmatprep.subr.bf16.mxu0 0
      %276 = vmatpush1.bf16.msra.mxu0 %v248
      %277 = vmatprep.subr.bf16.mxu0 0
      %278 = vmatpush1.bf16.msra.mxu0 0
      %279 = vmatprep.subr.bf16.mxu0 0
      %280 = vmatpush1.bf16.msra.mxu0 0
      %281 = vmatprep.subr.bf16.mxu0 0
      %282 = vmatpush1.bf16.msra.mxu0 0
      %283 = vmatprep.subr.bf16.mxu0 0
      %284 = vmatpush1.bf16.msra.mxu0 0
      %285 = vmatprep.subr.bf16.mxu0 0
      %286 = vmatpush1.bf16.msra.mxu0 0
      %287 = vmatprep.subr.bf16.mxu0 0
      %288 = vmatpush1.bf16.msra.mxu0 0
      %289 = vmatprep.subr.bf16.mxu0 0
      %290 = vmatpush1.bf16.msra.mxu0 0
      %291 = vmatprep.subr.bf16.mxu0 0
      %292 = vmatpush1.bf16.msra.mxu0 0
      %293 = vmatprep.subr.bf16.mxu0 0
      %294 = vmatpush1.bf16.msra.mxu0 0
      %295 = vmatprep.subr.bf16.mxu0 0
      %296 = vmatpush1.bf16.msra.mxu0 0
      %297 = vmatprep.subr.bf16.mxu0 0
      %298 = vmatpush1.bf16.msra.mxu0 0
      %299 = vmatprep.subr.bf16.mxu0 0
      %300 = vmatpush1.bf16.msra.mxu0 0
      %301 = vmatprep.subr.bf16.mxu0 0
      %302 = vmatpush1.bf16.msra.mxu0 0
      %303 = vmatprep.subr.bf16.mxu0 0
      %304 = vmatpush1.bf16.msra.mxu0 0
      %305 = vmatprep.subr.bf16.mxu0 0
      %306 = vmatpush1.bf16.msra.mxu0 0
      %307 = vmatprep.mubr.bf16.mxu0 0
      %308 = vmatmul.mubr.bf16.gmra.mrb[0].mxu0 %v252
      %v309 = vpop.f32.mrb[0].mxu0
      %v310 = vadd.f32 %v242, %v309
      %v311 = vpop.f32.mrb[0].mxu0
      %v312 = vpop.f32.mrb[0].mxu0
      %v313 = vadd.f32 %v242, %v312
      %v314 = vpop.f32.mrb[0].mxu0
      %315 = vmatprep.mubr.bf16.mxu0 0
      %316 = vmatmul.mubr.bf16.gmra.mrb[0].mxu0 %v255
      %v317 = vpop.f32.mrb[0].mxu0
      %v318 = vadd.f32 %v242, %v317
      %v319 = vpop.f32.mrb[0].mxu0
      %v320 = vpop.f32.mrb[0].mxu0
      %v321 = vadd.f32 %v242, %v320
      %v322 = vpop.f32.mrb[0].mxu0
      %323 = vmatprep.mubr.bf16.mxu0 0
      %324 = vmatmul.mubr.bf16.gmra.mrb[0].mxu0 %v258
      %v325 = vpop.f32.mrb[0].mxu0
      %v326 = vadd.f32 %v242, %v325
      %v327 = vpop.f32.mrb[0].mxu0
      %v328 = vpop.f32.mrb[0].mxu0
      %v329 = vadd.f32 %v242, %v328
      %v330 = vpop.f32.mrb[0].mxu0
      %331 = vmatprep.mubr.bf16.mxu0 0
      %332 = vmatmul.mubr.bf16.gmra.mrb[0].mxu0 %v261
      %v333 = vpop.f32.mrb[0].mxu0
      %v334 = vadd.f32 %v242, %v333
      %v335 = vpop.f32.mrb[0].mxu0
      %v336 = vpop.f32.mrb[0].mxu0
      %v337 = vadd.f32 %v242, %v336
      %v338 = vpop.f32.mrb[0].mxu0
      %339 = vmatprep.mubr.bf16.mxu0 0
      %340 = vmatmul.mubr.bf16.gmra.mrb[0].mxu0 %v264
      %v341 = vpop.f32.mrb[0].mxu0
      %v342 = vadd.f32 %v242, %v341
      %v343 = vpop.f32.mrb[0].mxu0
      %v344 = vpop.f32.mrb[0].mxu0
      %v345 = vadd.f32 %v242, %v344
      %v346 = vpop.f32.mrb[0].mxu0
      %347 = vmatprep.mubr.bf16.mxu0 0
      %348 = vmatmul.mubr.bf16.gmra.mrb[0].mxu0 %v267
      %v349 = vpop.f32.mrb[0].mxu0
      %v350 = vadd.f32 %v242, %v349
      %v351 = vpop.f32.mrb[0].mxu0
      %v352 = vpop.f32.mrb[0].mxu0
      %v353 = vadd.f32 %v242, %v352
      %v354 = vpop.f32.mrb[0].mxu0
      %355 = vmatprep.mubr.bf16.mxu0 0
      %356 = vmatmul.mubr.bf16.gmra.mrb[0].mxu0 %v270
      %v357 = vpop.f32.mrb[0].mxu0
      %v358 = vadd.f32 %v242, %v357
      %v359 = vpop.f32.mrb[0].mxu0
      %v360 = vpop.f32.mrb[0].mxu0
      %v361 = vadd.f32 %v242, %v360
      %v362 = vpop.f32.mrb[0].mxu0
      %363 = vmatprep.mubr.bf16.mxu0 0
      %364 = vmatmul.mubr.bf16.gmra.mrb[0].mxu0 %v273
      %v365 = vpop.f32.mrb[0].mxu0
      %v366 = vadd.f32 %v242, %v365
      %v367 = vpop.f32.mrb[0].mxu0
      %v368 = vpop.f32.mrb[0].mxu0
      %v369 = vadd.f32 %v242, %v368
      %v370 = vpop.f32.mrb[0].mxu0
      %371 = vdwg.mxu0
      %v372 = vmax.f32 %v310, 0.0
      %v373 = vmax.f32 %v313, 0.0
      %v374 = vmax.f32 %v318, 0.0
      %v375 = vmax.f32 %v321, 0.0
      %v376 = vmax.f32 %v326, 0.0
      %v377 = vmax.f32 %v329, 0.0
      %v378 = vmax.f32 %v334, 0.0
      %v379 = vmax.f32 %v337, 0.0
      %v380 = vmax.f32 %v342, 0.0
      %v381 = vmax.f32 %v345, 0.0
      %v382 = vmax.f32 %v350, 0.0
      %v383 = vmax.f32 %v353, 0.0
      %v384 = vmax.f32 %v358, 0.0
      %v385 = vmax.f32 %v361, 0.0
      %v386 = vmax.f32 %v366, 0.0
      %v387 = vmax.f32 %v369, 0.0
      %v388 = vpack.c.bf16 %v373, %v372
      %v389 = vpack.c.bf16 %v375, %v374
      %v390 = vpack.c.bf16 %v377, %v376
      %v391 = vpack.c.bf16 %v379, %v378
      %v392 = vpack.c.bf16 %v381, %v380
      %v393 = vpack.c.bf16 %v383, %v382
      %v394 = vpack.c.bf16 %v385, %v384
      %v395 = vpack.c.bf16 %v387, %v386
      %s396 = scalar_lea.vmem %s1, 64
      %v397 = vld [vmem:[%s396] sm:$0xf]
      %v398 = vld [vmem:[%s396 + $0x4] sm:$0xf]
      %v399 = vld [vmem:[%s396 + $0x8] sm:$0xf]
      %v400 = vld [vmem:[%s396 + $0xc] sm:$0xf]
      %v401 = vld [vmem:[%s396 + $0x10] sm:$0xf]
      %v402 = vld [vmem:[%s396 + $0x14] sm:$0xf]
      %v403 = vld [vmem:[%s396 + $0x18] sm:$0xf]
      %v404 = vld [vmem:[%s396 + $0x1c] sm:$0xf]
      %v405 = vld [vmem:[%s396 + $0x20] sm:$0xf]
      %v406 = vld [vmem:[%s396 + $0x24] sm:$0xf]
      %v407 = vld [vmem:[%s396 + $0x28] sm:$0xf]
      %v408 = vld [vmem:[%s396 + $0x2c] sm:$0xf]
      %v409 = vld [vmem:[%s396 + $0x30] sm:$0xf]
      %v410 = vld [vmem:[%s396 + $0x34] sm:$0xf]
      %v411 = vld [vmem:[%s396 + $0x38] sm:$0xf]
      %v412 = vld [vmem:[%s396 + $0x3c] sm:$0xf]
      %s413 = scalar_lea.vmem %s2, 1
      %v414 = vld [vmem:[%s413] sm:$0x1]
      %v416 = vlaneseq
      %v417 = vshrl.u32 %v416, 7
      %v418 = vsub.s32 0, %v417
      %v419 = vrot.slane %v414, %v418
      %v437 = vunpack.c.l.b16 %v397
      %v438 = vunpack.c.l.b16 %v398
      %v439 = vunpack.c.l.b16 %v399
      %v440 = vunpack.c.l.b16 %v400
      %v441 = vunpack.c.l.b16 %v401
      %v442 = vunpack.c.l.b16 %v402
      %v443 = vunpack.c.l.b16 %v403
      %v444 = vunpack.c.l.b16 %v404
      %v445 = vunpack.c.l.b16 %v405
      %v446 = vunpack.c.l.b16 %v406
      %v447 = vunpack.c.l.b16 %v407
      %v448 = vunpack.c.l.b16 %v408
      %v449 = vunpack.c.l.b16 %v409
      %v450 = vunpack.c.l.b16 %v410
      %v451 = vunpack.c.l.b16 %v411
      %v452 = vunpack.c.l.b16 %v412
      %v453 = vpack.c.b16 %v438, %v437
      %v454 = vpack.c.b16 %v440, %v439
      %v455 = vpack.c.b16 %v442, %v441
      %v456 = vpack.c.b16 %v444, %v443
      %v457 = vpack.c.b16 %v446, %v445
      %v458 = vpack.c.b16 %v448, %v447
      %v459 = vpack.c.b16 %v450, %v449
      %v460 = vpack.c.b16 %v452, %v451
      %469 = vmatprep.subr.bf16.mxu0 0
      %470 = vmatpush1.bf16.msra.mxu0 %v453
      %471 = vmatprep.subr.bf16.mxu0 0
      %472 = vmatpush1.bf16.msra.mxu0 %v454
      %473 = vmatprep.subr.bf16.mxu0 0
      %474 = vmatpush1.bf16.msra.mxu0 %v455
      %475 = vmatprep.subr.bf16.mxu0 0
      %476 = vmatpush1.bf16.msra.mxu0 %v456
      %477 = vmatprep.subr.bf16.mxu0 0
      %478 = vmatpush1.bf16.msra.mxu0 %v457
      %479 = vmatprep.subr.bf16.mxu0 0
      %480 = vmatpush1.bf16.msra.mxu0 %v458
      %481 = vmatprep.subr.bf16.mxu0 0
      %482 = vmatpush1.bf16.msra.mxu0 %v459
      %483 = vmatprep.subr.bf16.mxu0 0
      %484 = vmatpush1.bf16.msra.mxu0 %v460
      %485 = vmatprep.subr.bf16.mxu0 0
      %486 = vmatpush1.bf16.msra.mxu0 0
      %487 = vmatprep.subr.bf16.mxu0 0
      %488 = vmatpush1.bf16.msra.mxu0 0
      %489 = vmatprep.subr.bf16.mxu0 0
      %490 = vmatpush1.bf16.msra.mxu0 0
      %491 = vmatprep.subr.bf16.mxu0 0
      %492 = vmatpush1.bf16.msra.mxu0 0
      %493 = vmatprep.subr.bf16.mxu0 0
      %494 = vmatpush1.bf16.msra.mxu0 0
      %495 = vmatprep.subr.bf16.mxu0 0
      %496 = vmatpush1.bf16.msra.mxu0 0
      %497 = vmatprep.subr.bf16.mxu0 0
      %498 = vmatpush1.bf16.msra.mxu0 0
      %499 = vmatprep.subr.bf16.mxu0 0
      %500 = vmatpush1.bf16.msra.mxu0 0
      %501 = vmatprep.mubr.bf16.mxu0 0
      %502 = vmatmul.mubr.bf16.gmra.mrb[0].mxu0 %v388
      %v503 = vpop.f32.mrb[0].mxu0
      %v504 = vadd.f32 %v419, %v503
      %v505 = vpop.f32.mrb[0].mxu0
      %v506 = vpop.f32.mrb[0].mxu0
      %v507 = vadd.f32 %v419, %v506
      %v508 = vpop.f32.mrb[0].mxu0
      %509 = vmatprep.mubr.bf16.mxu0 0
      %510 = vmatmul.mubr.bf16.gmra.mrb[0].mxu0 %v389
      %v511 = vpop.f32.mrb[0].mxu0
      %v512 = vadd.f32 %v419, %v511
      %v513 = vpop.f32.mrb[0].mxu0
      %v514 = vpop.f32.mrb[0].mxu0
      %v515 = vadd.f32 %v419, %v514
      %v516 = vpop.f32.mrb[0].mxu0
      %517 = vmatprep.mubr.bf16.mxu0 0
      %518 = vmatmul.mubr.bf16.gmra.mrb[0].mxu0 %v390
      %v519 = vpop.f32.mrb[0].mxu0
      %v520 = vadd.f32 %v419, %v519
      %v521 = vpop.f32.mrb[0].mxu0
      %v522 = vpop.f32.mrb[0].mxu0
      %v523 = vadd.f32 %v419, %v522
      %v524 = vpop.f32.mrb[0].mxu0
      %525 = vmatprep.mubr.bf16.mxu0 0
      %526 = vmatmul.mubr.bf16.gmra.mrb[0].mxu0 %v391
      %v527 = vpop.f32.mrb[0].mxu0
      %v528 = vadd.f32 %v419, %v527
      %v529 = vpop.f32.mrb[0].mxu0
      %v530 = vpop.f32.mrb[0].mxu0
      %v531 = vadd.f32 %v419, %v530
      %v532 = vpop.f32.mrb[0].mxu0
      %533 = vmatprep.mubr.bf16.mxu0 0
      %534 = vmatmul.mubr.bf16.gmra.mrb[0].mxu0 %v392
      %v535 = vpop.f32.mrb[0].mxu0
      %v536 = vadd.f32 %v419, %v535
      %v537 = vpop.f32.mrb[0].mxu0
      %v538 = vpop.f32.mrb[0].mxu0
      %v539 = vadd.f32 %v419, %v538
      %v540 = vpop.f32.mrb[0].mxu0
      %541 = vmatprep.mubr.bf16.mxu0 0
      %542 = vmatmul.mubr.bf16.gmra.mrb[0].mxu0 %v393
      %v543 = vpop.f32.mrb[0].mxu0
      %v544 = vadd.f32 %v419, %v543
      %v545 = vpop.f32.mrb[0].mxu0
      %v546 = vpop.f32.mrb[0].mxu0
      %v547 = vadd.f32 %v419, %v546
      %v548 = vpop.f32.mrb[0].mxu0
      %549 = vmatprep.mubr.bf16.mxu0 0
      %550 = vmatmul.mubr.bf16.gmra.mrb[0].mxu0 %v394
      %v551 = vpop.f32.mrb[0].mxu0
      %v552 = vadd.f32 %v419, %v551
      %v553 = vpop.f32.mrb[0].mxu0
      %v554 = vpop.f32.mrb[0].mxu0
      %v555 = vadd.f32 %v419, %v554
      %v556 = vpop.f32.mrb[0].mxu0
      %557 = vmatprep.mubr.bf16.mxu0 0
      %558 = vmatmul.mubr.bf16.gmra.mrb[0].mxu0 %v395
      %v559 = vpop.f32.mrb[0].mxu0
      %v560 = vadd.f32 %v419, %v559
      %v561 = vpop.f32.mrb[0].mxu0
      %v562 = vpop.f32.mrb[0].mxu0
      %v563 = vadd.f32 %v419, %v562
      %v564 = vpop.f32.mrb[0].mxu0
      %565 = vdwg.mxu0
      %v566 = vmax.f32 %v504, 0.0
      %v567 = vmax.f32 %v507, 0.0
      %v568 = vmax.f32 %v512, 0.0
      %v569 = vmax.f32 %v515, 0.0
      %v570 = vmax.f32 %v520, 0.0
      %v571 = vmax.f32 %v523, 0.0
      %v572 = vmax.f32 %v528, 0.0
      %v573 = vmax.f32 %v531, 0.0
      %v574 = vmax.f32 %v536, 0.0
      %v575 = vmax.f32 %v539, 0.0
      %v576 = vmax.f32 %v544, 0.0
      %v577 = vmax.f32 %v547, 0.0
      %v578 = vmax.f32 %v552, 0.0
      %v579 = vmax.f32 %v555, 0.0
      %v580 = vmax.f32 %v560, 0.0
      %v581 = vmax.f32 %v563, 0.0
      %v582 = vpack.c.bf16 %v567, %v566
      %v583 = vpack.c.bf16 %v569, %v568
      %v584 = vpack.c.bf16 %v571, %v570
      %v585 = vpack.c.bf16 %v573, %v572
      %v586 = vpack.c.bf16 %v575, %v574
      %v587 = vpack.c.bf16 %v577, %v576
      %v588 = vpack.c.bf16 %v579, %v578
      %v589 = vpack.c.bf16 %v581, %v580
      %s590 = scalar_lea.vmem %s1, 128
      %v591 = vld [vmem:[%s590] sm:$0xf]
      %v592 = vld [vmem:[%s590 + $0x4] sm:$0xf]
      %v593 = vld [vmem:[%s590 + $0x8] sm:$0xf]
      %v594 = vld [vmem:[%s590 + $0xc] sm:$0xf]
      %v595 = vld [vmem:[%s590 + $0x10] sm:$0xf]
      %v596 = vld [vmem:[%s590 + $0x14] sm:$0xf]
      %v597 = vld [vmem:[%s590 + $0x18] sm:$0xf]
      %v598 = vld [vmem:[%s590 + $0x1c] sm:$0xf]
      %v599 = vld [vmem:[%s590 + $0x20] sm:$0xf]
      %v600 = vld [vmem:[%s590 + $0x24] sm:$0xf]
      %v601 = vld [vmem:[%s590 + $0x28] sm:$0xf]
      %v602 = vld [vmem:[%s590 + $0x2c] sm:$0xf]
      %v603 = vld [vmem:[%s590 + $0x30] sm:$0xf]
      %v604 = vld [vmem:[%s590 + $0x34] sm:$0xf]
      %v605 = vld [vmem:[%s590 + $0x38] sm:$0xf]
      %v606 = vld [vmem:[%s590 + $0x3c] sm:$0xf]
      %s607 = scalar_lea.vmem %s2, 2
      %v608 = vld [vmem:[%s607] sm:$0x1]
      %v610 = vlaneseq
      %v611 = vshrl.u32 %v610, 7
      %v612 = vsub.s32 0, %v611
      %v613 = vrot.slane %v608, %v612
      %v631 = vunpack.c.l.b16 %v591
      %v632 = vunpack.c.l.b16 %v592
      %v633 = vunpack.c.l.b16 %v593
      %v634 = vunpack.c.l.b16 %v594
      %v635 = vunpack.c.l.b16 %v595
      %v636 = vunpack.c.l.b16 %v596
      %v637 = vunpack.c.l.b16 %v597
      %v638 = vunpack.c.l.b16 %v598
      %v639 = vunpack.c.l.b16 %v599
      %v640 = vunpack.c.l.b16 %v600
      %v641 = vunpack.c.l.b16 %v601
      %v642 = vunpack.c.l.b16 %v602
      %v643 = vunpack.c.l.b16 %v603
      %v644 = vunpack.c.l.b16 %v604
      %v645 = vunpack.c.l.b16 %v605
      %v646 = vunpack.c.l.b16 %v606
      %v647 = vpack.c.b16 %v632, %v631
      %v648 = vpack.c.b16 %v634, %v633
      %v649 = vpack.c.b16 %v636, %v635
      %v650 = vpack.c.b16 %v638, %v637
      %v651 = vpack.c.b16 %v640, %v639
      %v652 = vpack.c.b16 %v642, %v641
      %v653 = vpack.c.b16 %v644, %v643
      %v654 = vpack.c.b16 %v646, %v645
      %663 = vmatprep.subr.bf16.mxu0 0
      %664 = vmatpush1.bf16.msra.mxu0 %v647
      %665 = vmatprep.subr.bf16.mxu0 0
      %666 = vmatpush1.bf16.msra.mxu0 %v648
      %667 = vmatprep.subr.bf16.mxu0 0
      %668 = vmatpush1.bf16.msra.mxu0 %v649
      %669 = vmatprep.subr.bf16.mxu0 0
      %670 = vmatpush1.bf16.msra.mxu0 %v650
      %671 = vmatprep.subr.bf16.mxu0 0
      %672 = vmatpush1.bf16.msra.mxu0 %v651
      %673 = vmatprep.subr.bf16.mxu0 0
      %674 = vmatpush1.bf16.msra.mxu0 %v652
      %675 = vmatprep.subr.bf16.mxu0 0
      %676 = vmatpush1.bf16.msra.mxu0 %v653
      %677 = vmatprep.subr.bf16.mxu0 0
      %678 = vmatpush1.bf16.msra.mxu0 %v654
      %679 = vmatprep.subr.bf16.mxu0 0
      %680 = vmatpush1.bf16.msra.mxu0 0
      %681 = vmatprep.subr.bf16.mxu0 0
      %682 = vmatpush1.bf16.msra.mxu0 0
      %683 = vmatprep.subr.bf16.mxu0 0
      %684 = vmatpush1.bf16.msra.mxu0 0
      %685 = vmatprep.subr.bf16.mxu0 0
      %686 = vmatpush1.bf16.msra.mxu0 0
      %687 = vmatprep.subr.bf16.mxu0 0
      %688 = vmatpush1.bf16.msra.mxu0 0
      %689 = vmatprep.subr.bf16.mxu0 0
      %690 = vmatpush1.bf16.msra.mxu0 0
      %691 = vmatprep.subr.bf16.mxu0 0
      %692 = vmatpush1.bf16.msra.mxu0 0
      %693 = vmatprep.subr.bf16.mxu0 0
      %694 = vmatpush1.bf16.msra.mxu0 0
      %695 = vmatprep.mubr.bf16.mxu0 0
      %696 = vmatmul.mubr.bf16.gmra.mrb[0].mxu0 %v582
      %v697 = vpop.f32.mrb[0].mxu0
      %v698 = vadd.f32 %v613, %v697
      %v699 = vpop.f32.mrb[0].mxu0
      %v700 = vpop.f32.mrb[0].mxu0
      %v701 = vadd.f32 %v613, %v700
      %v702 = vpop.f32.mrb[0].mxu0
      %703 = vmatprep.mubr.bf16.mxu0 0
      %704 = vmatmul.mubr.bf16.gmra.mrb[0].mxu0 %v583
      %v705 = vpop.f32.mrb[0].mxu0
      %v706 = vadd.f32 %v613, %v705
      %v707 = vpop.f32.mrb[0].mxu0
      %v708 = vpop.f32.mrb[0].mxu0
      %v709 = vadd.f32 %v613, %v708
      %v710 = vpop.f32.mrb[0].mxu0
      %711 = vmatprep.mubr.bf16.mxu0 0
      %712 = vmatmul.mubr.bf16.gmra.mrb[0].mxu0 %v584
      %v713 = vpop.f32.mrb[0].mxu0
      %v714 = vadd.f32 %v613, %v713
      %v715 = vpop.f32.mrb[0].mxu0
      %v716 = vpop.f32.mrb[0].mxu0
      %v717 = vadd.f32 %v613, %v716
      %v718 = vpop.f32.mrb[0].mxu0
      %719 = vmatprep.mubr.bf16.mxu0 0
      %720 = vmatmul.mubr.bf16.gmra.mrb[0].mxu0 %v585
      %v721 = vpop.f32.mrb[0].mxu0
      %v722 = vadd.f32 %v613, %v721
      %v723 = vpop.f32.mrb[0].mxu0
      %v724 = vpop.f32.mrb[0].mxu0
      %v725 = vadd.f32 %v613, %v724
      %v726 = vpop.f32.mrb[0].mxu0
      %727 = vmatprep.mubr.bf16.mxu0 0
      %728 = vmatmul.mubr.bf16.gmra.mrb[0].mxu0 %v586
      %v729 = vpop.f32.mrb[0].mxu0
      %v730 = vadd.f32 %v613, %v729
      %v731 = vpop.f32.mrb[0].mxu0
      %v732 = vpop.f32.mrb[0].mxu0
      %v733 = vadd.f32 %v613, %v732
      %v734 = vpop.f32.mrb[0].mxu0
      %735 = vmatprep.mubr.bf16.mxu0 0
      %736 = vmatmul.mubr.bf16.gmra.mrb[0].mxu0 %v587
      %v737 = vpop.f32.mrb[0].mxu0
      %v738 = vadd.f32 %v613, %v737
      %v739 = vpop.f32.mrb[0].mxu0
      %v740 = vpop.f32.mrb[0].mxu0
      %v741 = vadd.f32 %v613, %v740
      %v742 = vpop.f32.mrb[0].mxu0
      %743 = vmatprep.mubr.bf16.mxu0 0
      %744 = vmatmul.mubr.bf16.gmra.mrb[0].mxu0 %v588
      %v745 = vpop.f32.mrb[0].mxu0
      %v746 = vadd.f32 %v613, %v745
      %v747 = vpop.f32.mrb[0].mxu0
      %v748 = vpop.f32.mrb[0].mxu0
      %v749 = vadd.f32 %v613, %v748
      %v750 = vpop.f32.mrb[0].mxu0
      %751 = vmatprep.mubr.bf16.mxu0 0
      %752 = vmatmul.mubr.bf16.gmra.mrb[0].mxu0 %v589
      %v753 = vpop.f32.mrb[0].mxu0
      %v754 = vadd.f32 %v613, %v753
      %v755 = vpop.f32.mrb[0].mxu0
      %v756 = vpop.f32.mrb[0].mxu0
      %v757 = vadd.f32 %v613, %v756
      %v758 = vpop.f32.mrb[0].mxu0
      %759 = vdwg.mxu0
      %v760 = vmax.f32 %v698, 0.0
      %v761 = vmax.f32 %v701, 0.0
      %v762 = vmax.f32 %v706, 0.0
      %v763 = vmax.f32 %v709, 0.0
      %v764 = vmax.f32 %v714, 0.0
      %v765 = vmax.f32 %v717, 0.0
      %v766 = vmax.f32 %v722, 0.0
      %v767 = vmax.f32 %v725, 0.0
      %v768 = vmax.f32 %v730, 0.0
      %v769 = vmax.f32 %v733, 0.0
      %v770 = vmax.f32 %v738, 0.0
      %v771 = vmax.f32 %v741, 0.0
      %v772 = vmax.f32 %v746, 0.0
      %v773 = vmax.f32 %v749, 0.0
      %v774 = vmax.f32 %v754, 0.0
      %v775 = vmax.f32 %v757, 0.0
      %v776 = vpack.c.bf16 %v761, %v760
      %v777 = vpack.c.bf16 %v763, %v762
      %v778 = vpack.c.bf16 %v765, %v764
      %v779 = vpack.c.bf16 %v767, %v766
      %v780 = vpack.c.bf16 %v769, %v768
      %v781 = vpack.c.bf16 %v771, %v770
      %v782 = vpack.c.bf16 %v773, %v772
      %v783 = vpack.c.bf16 %v775, %v774
      %s784 = scalar_lea.vmem %s1, 192
      %v785 = vld [vmem:[%s784] sm:$0xf]
      %v786 = vld [vmem:[%s784 + $0x4] sm:$0xf]
      %v787 = vld [vmem:[%s784 + $0x8] sm:$0xf]
      %v788 = vld [vmem:[%s784 + $0xc] sm:$0xf]
      %v789 = vld [vmem:[%s784 + $0x10] sm:$0xf]
      %v790 = vld [vmem:[%s784 + $0x14] sm:$0xf]
      %v791 = vld [vmem:[%s784 + $0x18] sm:$0xf]
      %v792 = vld [vmem:[%s784 + $0x1c] sm:$0xf]
      %v793 = vld [vmem:[%s784 + $0x20] sm:$0xf]
      %v794 = vld [vmem:[%s784 + $0x24] sm:$0xf]
      %v795 = vld [vmem:[%s784 + $0x28] sm:$0xf]
      %v796 = vld [vmem:[%s784 + $0x2c] sm:$0xf]
      %v797 = vld [vmem:[%s784 + $0x30] sm:$0xf]
      %v798 = vld [vmem:[%s784 + $0x34] sm:$0xf]
      %v799 = vld [vmem:[%s784 + $0x38] sm:$0xf]
      %v800 = vld [vmem:[%s784 + $0x3c] sm:$0xf]
      %s801 = scalar_lea.vmem %s2, 3
      %v802 = vld [vmem:[%s801] sm:$0x1]
      %v804 = vlaneseq
      %v805 = vshrl.u32 %v804, 7
      %v806 = vsub.s32 0, %v805
      %v807 = vrot.slane %v802, %v806
      %v825 = vunpack.c.l.b16 %v785
      %v826 = vunpack.c.l.b16 %v786
      %v827 = vunpack.c.l.b16 %v787
      %v828 = vunpack.c.l.b16 %v788
      %v829 = vunpack.c.l.b16 %v789
      %v830 = vunpack.c.l.b16 %v790
      %v831 = vunpack.c.l.b16 %v791
      %v832 = vunpack.c.l.b16 %v792
      %v833 = vunpack.c.l.b16 %v793
      %v834 = vunpack.c.l.b16 %v794
      %v835 = vunpack.c.l.b16 %v795
      %v836 = vunpack.c.l.b16 %v796
      %v837 = vunpack.c.l.b16 %v797
      %v838 = vunpack.c.l.b16 %v798
      %v839 = vunpack.c.l.b16 %v799
      %v840 = vunpack.c.l.b16 %v800
      %v841 = vpack.c.b16 %v826, %v825
      %v842 = vpack.c.b16 %v828, %v827
      %v843 = vpack.c.b16 %v830, %v829
      %v844 = vpack.c.b16 %v832, %v831
      %v845 = vpack.c.b16 %v834, %v833
      %v846 = vpack.c.b16 %v836, %v835
      %v847 = vpack.c.b16 %v838, %v837
      %v848 = vpack.c.b16 %v840, %v839
      %857 = vmatprep.subr.bf16.mxu0 0
      %858 = vmatpush1.bf16.msra.mxu0 %v841
      %859 = vmatprep.subr.bf16.mxu0 0
      %860 = vmatpush1.bf16.msra.mxu0 %v842
      %861 = vmatprep.subr.bf16.mxu0 0
      %862 = vmatpush1.bf16.msra.mxu0 %v843
      %863 = vmatprep.subr.bf16.mxu0 0
      %864 = vmatpush1.bf16.msra.mxu0 %v844
      %865 = vmatprep.subr.bf16.mxu0 0
      %866 = vmatpush1.bf16.msra.mxu0 %v845
      %867 = vmatprep.subr.bf16.mxu0 0
      %868 = vmatpush1.bf16.msra.mxu0 %v846
      %869 = vmatprep.subr.bf16.mxu0 0
      %870 = vmatpush1.bf16.msra.mxu0 %v847
      %871 = vmatprep.subr.bf16.mxu0 0
      %872 = vmatpush1.bf16.msra.mxu0 %v848
      %873 = vmatprep.subr.bf16.mxu0 0
      %874 = vmatpush1.bf16.msra.mxu0 0
      %875 = vmatprep.subr.bf16.mxu0 0
      %876 = vmatpush1.bf16.msra.mxu0 0
      %877 = vmatprep.subr.bf16.mxu0 0
      %878 = vmatpush1.bf16.msra.mxu0 0
      %879 = vmatprep.subr.bf16.mxu0 0
      %880 = vmatpush1.bf16.msra.mxu0 0
      %881 = vmatprep.subr.bf16.mxu0 0
      %882 = vmatpush1.bf16.msra.mxu0 0
      %883 = vmatprep.subr.bf16.mxu0 0
      %884 = vmatpush1.bf16.msra.mxu0 0
      %885 = vmatprep.subr.bf16.mxu0 0
      %886 = vmatpush1.bf16.msra.mxu0 0
      %887 = vmatprep.subr.bf16.mxu0 0
      %888 = vmatpush1.bf16.msra.mxu0 0
      %889 = vmatprep.mubr.bf16.mxu0 0
      %890 = vmatmul.mubr.bf16.gmra.mrb[0].mxu0 %v776
      %v891 = vpop.f32.mrb[0].mxu0
      %v892 = vadd.f32 %v807, %v891
      %v893 = vpop.f32.mrb[0].mxu0
      %v894 = vpop.f32.mrb[0].mxu0
      %v895 = vadd.f32 %v807, %v894
      %v896 = vpop.f32.mrb[0].mxu0
      %897 = vmatprep.mubr.bf16.mxu0 0
      %898 = vmatmul.mubr.bf16.gmra.mrb[0].mxu0 %v777
      %v899 = vpop.f32.mrb[0].mxu0
      %v900 = vadd.f32 %v807, %v899
      %v901 = vpop.f32.mrb[0].mxu0
      %v902 = vpop.f32.mrb[0].mxu0
      %v903 = vadd.f32 %v807, %v902
      %v904 = vpop.f32.mrb[0].mxu0
      %905 = vmatprep.mubr.bf16.mxu0 0
      %906 = vmatmul.mubr.bf16.gmra.mrb[0].mxu0 %v778
      %v907 = vpop.f32.mrb[0].mxu0
      %v908 = vadd.f32 %v807, %v907
      %v909 = vpop.f32.mrb[0].mxu0
      %v910 = vpop.f32.mrb[0].mxu0
      %v911 = vadd.f32 %v807, %v910
      %v912 = vpop.f32.mrb[0].mxu0
      %913 = vmatprep.mubr.bf16.mxu0 0
      %914 = vmatmul.mubr.bf16.gmra.mrb[0].mxu0 %v779
      %v915 = vpop.f32.mrb[0].mxu0
      %v916 = vadd.f32 %v807, %v915
      %v917 = vpop.f32.mrb[0].mxu0
      %v918 = vpop.f32.mrb[0].mxu0
      %v919 = vadd.f32 %v807, %v918
      %v920 = vpop.f32.mrb[0].mxu0
      %921 = vmatprep.mubr.bf16.mxu0 0
      %922 = vmatmul.mubr.bf16.gmra.mrb[0].mxu0 %v780
      %v923 = vpop.f32.mrb[0].mxu0
      %v924 = vadd.f32 %v807, %v923
      %v925 = vpop.f32.mrb[0].mxu0
      %v926 = vpop.f32.mrb[0].mxu0
      %v927 = vadd.f32 %v807, %v926
      %v928 = vpop.f32.mrb[0].mxu0
      %929 = vmatprep.mubr.bf16.mxu0 0
      %930 = vmatmul.mubr.bf16.gmra.mrb[0].mxu0 %v781
      %v931 = vpop.f32.mrb[0].mxu0
      %v932 = vadd.f32 %v807, %v931
      %v933 = vpop.f32.mrb[0].mxu0
      %v934 = vpop.f32.mrb[0].mxu0
      %v935 = vadd.f32 %v807, %v934
      %v936 = vpop.f32.mrb[0].mxu0
      %937 = vmatprep.mubr.bf16.mxu0 0
      %938 = vmatmul.mubr.bf16.gmra.mrb[0].mxu0 %v782
      %v939 = vpop.f32.mrb[0].mxu0
      %v940 = vadd.f32 %v807, %v939
      %v941 = vpop.f32.mrb[0].mxu0
      %v942 = vpop.f32.mrb[0].mxu0
      %v943 = vadd.f32 %v807, %v942
      %v944 = vpop.f32.mrb[0].mxu0
      %945 = vmatprep.mubr.bf16.mxu0 0
      %946 = vmatmul.mubr.bf16.gmra.mrb[0].mxu0 %v783
      %v947 = vpop.f32.mrb[0].mxu0
      %v948 = vadd.f32 %v807, %v947
      %v949 = vpop.f32.mrb[0].mxu0
      %v950 = vpop.f32.mrb[0].mxu0
      %v951 = vadd.f32 %v807, %v950
      %v952 = vpop.f32.mrb[0].mxu0
      %953 = vdwg.mxu0
      %955 = vset.pattern.permute.xlu0 8
      %956 = vperm.xlu0 %955, %v892
      %v957 = vpop.permute.xlu0 %956
      %960 = vset.pattern.permute.xlu0 8
      %961 = vperm.xlu0 %960, %v895
      %v962 = vpop.permute.xlu0 %961
      %965 = vset.pattern.permute.xlu0 8
      %966 = vperm.xlu0 %965, %v900
      %v967 = vpop.permute.xlu0 %966
      %970 = vset.pattern.permute.xlu0 8
      %971 = vperm.xlu0 %970, %v903
      %v972 = vpop.permute.xlu0 %971
      %975 = vset.pattern.permute.xlu0 8
      %976 = vperm.xlu0 %975, %v908
      %v977 = vpop.permute.xlu0 %976
      %980 = vset.pattern.permute.xlu0 8
      %981 = vperm.xlu0 %980, %v911
      %v982 = vpop.permute.xlu0 %981
      %985 = vset.pattern.permute.xlu0 8
      %986 = vperm.xlu0 %985, %v916
      %v987 = vpop.permute.xlu0 %986
      %990 = vset.pattern.permute.xlu0 8
      %991 = vperm.xlu0 %990, %v919
      %v992 = vpop.permute.xlu0 %991
      %995 = vset.pattern.permute.xlu0 8
      %996 = vperm.xlu0 %995, %v924
      %v997 = vpop.permute.xlu0 %996
      %1000 = vset.pattern.permute.xlu0 8
      %1001 = vperm.xlu0 %1000, %v927
      %v1002 = vpop.permute.xlu0 %1001
      %1005 = vset.pattern.permute.xlu0 8
      %1006 = vperm.xlu0 %1005, %v932
      %v1007 = vpop.permute.xlu0 %1006
      %1010 = vset.pattern.permute.xlu0 8
      %1011 = vperm.xlu0 %1010, %v935
      %v1012 = vpop.permute.xlu0 %1011
      %1015 = vset.pattern.permute.xlu0 8
      %1016 = vperm.xlu0 %1015, %v940
      %v1017 = vpop.permute.xlu0 %1016
      %1020 = vset.pattern.permute.xlu0 8
      %1021 = vperm.xlu0 %1020, %v943
      %v1022 = vpop.permute.xlu0 %1021
      %1025 = vset.pattern.permute.xlu0 8
      %1026 = vperm.xlu0 %1025, %v948
      %v1027 = vpop.permute.xlu0 %1026
      %1030 = vset.pattern.permute.xlu0 8
      %1031 = vperm.xlu0 %1030, %v951
      %v1032 = vpop.permute.xlu0 %1031
      %v1034 = vadd.f32 %v892, %v957
      %v1035 = vadd.f32 %v895, %v962
      %v1036 = vadd.f32 %v900, %v967
      %v1037 = vadd.f32 %v903, %v972
      %v1038 = vadd.f32 %v908, %v977
      %v1039 = vadd.f32 %v911, %v982
      %v1040 = vadd.f32 %v916, %v987
      %v1041 = vadd.f32 %v919, %v992
      %v1042 = vadd.f32 %v924, %v997
      %v1043 = vadd.f32 %v927, %v1002
      %v1044 = vadd.f32 %v932, %v1007
      %v1045 = vadd.f32 %v935, %v1012
      %v1046 = vadd.f32 %v940, %v1017
      %v1047 = vadd.f32 %v943, %v1022
      %v1048 = vadd.f32 %v948, %v1027
      %v1049 = vadd.f32 %v951, %v1032
      %vm1050 = vcmask 64512
      %1051 = vst.msk [vmem:[%s205] sm:$0xff] %vm1050, %v1034
      %1052 = vst.msk [vmem:[%s205 + $0x8] sm:$0xff] %vm1050, %v1035
      %1053 = vst.msk [vmem:[%s205 + $0x10] sm:$0xff] %vm1050, %v1036
      %1054 = vst.msk [vmem:[%s205 + $0x18] sm:$0xff] %vm1050, %v1037
      %1055 = vst.msk [vmem:[%s205 + $0x20] sm:$0xff] %vm1050, %v1038
      %1056 = vst.msk [vmem:[%s205 + $0x28] sm:$0xff] %vm1050, %v1039
      %1057 = vst.msk [vmem:[%s205 + $0x30] sm:$0xff] %vm1050, %v1040
      %1058 = vst.msk [vmem:[%s205 + $0x38] sm:$0xff] %vm1050, %v1041
      %1059 = vst.msk [vmem:[%s205 + $0x40] sm:$0xff] %vm1050, %v1042
      %1060 = vst.msk [vmem:[%s205 + $0x48] sm:$0xff] %vm1050, %v1043
      %1061 = vst.msk [vmem:[%s205 + $0x50] sm:$0xff] %vm1050, %v1044
      %1062 = vst.msk [vmem:[%s205 + $0x58] sm:$0xff] %vm1050, %v1045
      %1063 = vst.msk [vmem:[%s205 + $0x60] sm:$0xff] %vm1050, %v1046
      %1064 = vst.msk [vmem:[%s205 + $0x68] sm:$0xff] %vm1050, %v1047
      %1065 = vst.msk [vmem:[%s205 + $0x70] sm:$0xff] %vm1050, %v1048
      %1066 = vst.msk [vmem:[%s205 + $0x78] sm:$0xff] %vm1050, %v1049
      %v1067 = vlaneseq
      %v1068 = vshrl.u32 %v1067, 7
      %v1069 = vadd.s32 %v1068, 8
      %v1070 = vadd.s32 %v1068, 16
      %v1071 = vadd.s32 %v1068, 24
      %v1072 = vadd.s32 %v1068, 32
      %v1073 = vadd.s32 %v1068, 40
      %v1074 = vadd.s32 %v1068, 48
      %v1075 = vadd.s32 %v1068, 56
      %v1076 = vadd.s32 %v1068, 64
      %v1077 = vadd.s32 %v1068, 72
      %v1078 = vadd.s32 %v1068, 80
      %v1079 = vadd.s32 %v1068, 88
      %v1080 = vadd.s32 %v1068, 96
      %v1081 = vadd.s32 %v1068, 104
      %v1082 = vadd.s32 %v1068, 112
      %v1083 = vadd.s32 %v1068, 120
      %s1084 = smul.u32 %s16, 128
      %v1085 = vstv %s1084
      %v1086 = vadd.s32 %v1068, %v1085
      %v1087 = vadd.s32 %v1069, %v1085
      %v1088 = vadd.s32 %v1070, %v1085
      %v1089 = vadd.s32 %v1071, %v1085
      %v1090 = vadd.s32 %v1072, %v1085
      %v1091 = vadd.s32 %v1073, %v1085
      %v1092 = vadd.s32 %v1074, %v1085
      %v1093 = vadd.s32 %v1075, %v1085
      %v1094 = vadd.s32 %v1076, %v1085
      %v1095 = vadd.s32 %v1077, %v1085
      %v1096 = vadd.s32 %v1078, %v1085
      %v1097 = vadd.s32 %v1079, %v1085
      %v1098 = vadd.s32 %v1080, %v1085
      %v1099 = vadd.s32 %v1081, %v1085
      %v1100 = vadd.s32 %v1082, %v1085
      %v1101 = vadd.s32 %v1083, %v1085
      %v1102 = vlaneseq
      %v1103 = vand.u32 %v1102, 127
      %vm1104 = vcmp.lt.s32.totalorder %v1086, 200
      %vm1105 = vcmp.lt.s32.totalorder %v1087, 200
      %vm1106 = vcmp.lt.s32.totalorder %v1088, 200
      %vm1107 = vcmp.lt.s32.totalorder %v1089, 200
      %vm1108 = vcmp.lt.s32.totalorder %v1090, 200
      %vm1109 = vcmp.lt.s32.totalorder %v1091, 200
      %vm1110 = vcmp.lt.s32.totalorder %v1092, 200
      %vm1111 = vcmp.lt.s32.totalorder %v1093, 200
      %vm1112 = vcmp.lt.s32.totalorder %v1094, 200
      %vm1113 = vcmp.lt.s32.totalorder %v1095, 200
      %vm1114 = vcmp.lt.s32.totalorder %v1096, 200
      %vm1115 = vcmp.lt.s32.totalorder %v1097, 200
      %vm1116 = vcmp.lt.s32.totalorder %v1098, 200
      %vm1117 = vcmp.lt.s32.totalorder %v1099, 200
      %vm1118 = vcmp.lt.s32.totalorder %v1100, 200
      %vm1119 = vcmp.lt.s32.totalorder %v1101, 200
      %vm1120 = vcmp.lt.s32.totalorder %v1103, 8
      %vm1121 = vmand %vm1104, %vm1120
      %vm1122 = vmand %vm1105, %vm1120
      %vm1123 = vmand %vm1106, %vm1120
      %vm1124 = vmand %vm1107, %vm1120
      %vm1125 = vmand %vm1108, %vm1120
      %vm1126 = vmand %vm1109, %vm1120
      %vm1127 = vmand %vm1110, %vm1120
      %vm1128 = vmand %vm1111, %vm1120
      %vm1129 = vmand %vm1112, %vm1120
      %vm1130 = vmand %vm1113, %vm1120
      %vm1131 = vmand %vm1114, %vm1120
      %vm1132 = vmand %vm1115, %vm1120
      %vm1133 = vmand %vm1116, %vm1120
      %vm1134 = vmand %vm1117, %vm1120
      %vm1135 = vmand %vm1118, %vm1120
      %vm1136 = vmand %vm1119, %vm1120
      %v1137 = vsel %vm1121, %v892, 0.0
      %v1138 = vsel %vm1122, %v895, 0.0
      %v1139 = vsel %vm1123, %v900, 0.0
      %v1140 = vsel %vm1124, %v903, 0.0
      %v1141 = vsel %vm1125, %v908, 0.0
      %v1142 = vsel %vm1126, %v911, 0.0
      %v1143 = vsel %vm1127, %v916, 0.0
      %v1144 = vsel %vm1128, %v919, 0.0
      %v1145 = vsel %vm1129, %v924, 0.0
      %v1146 = vsel %vm1130, %v927, 0.0
      %v1147 = vsel %vm1131, %v932, 0.0
      %v1148 = vsel %vm1132, %v935, 0.0
      %v1149 = vsel %vm1133, %v940, 0.0
      %v1150 = vsel %vm1134, %v943, 0.0
      %v1151 = vsel %vm1135, %v948, 0.0
      %v1152 = vsel %vm1136, %v951, 0.0
      %v1153 = vadd.f32 %v1137, %v1138
      %v1154 = vadd.f32 %v1153, %v1139
      %v1155 = vadd.f32 %v1154, %v1140
      %v1156 = vadd.f32 %v1155, %v1141
      %v1157 = vadd.f32 %v1156, %v1142
      %v1158 = vadd.f32 %v1157, %v1143
      %v1159 = vadd.f32 %v1158, %v1144
      %v1160 = vadd.f32 %v1159, %v1145
      %v1161 = vadd.f32 %v1160, %v1146
      %v1162 = vadd.f32 %v1161, %v1147
      %v1163 = vadd.f32 %v1162, %v1148
      %v1164 = vadd.f32 %v1163, %v1149
      %v1165 = vadd.f32 %v1164, %v1150
      %v1166 = vadd.f32 %v1165, %v1151
      %v1167 = vadd.f32 %v1166, %v1152
      %v1168 = vrot.slane %v1167, 4
      %v1169 = vadd.f32 %v1167, %v1168
      %v1170 = vrot.slane %v1169, 2
      %v1171 = vadd.f32 %v1169, %v1170
      %v1172 = vrot.slane %v1171, 1
      %v1173 = vadd.f32 %v1171, %v1172
      %1174 = vst [vmem:[%s209] sm:$0x1] %v1173
      %s1175 = smul.u32 16, %s16
      %p1176 = scmp.lt.s32.totalorder %s1175, 31
      %s1177 = scalar_select %p1176, %s1175, 31
      %s1178 = smul.addr %s1177, 8
      %s1179 = scalar_lea.vmem %s3, %s1178
      %p1180 = scmp.lt.s32.totalorder %s16, 1
      %s1181 = scalar_select %p1180, %s16, 1
      %s1182 = scalar_lea.vmem %s4, %s1181
      // Predicated region
      $region33: #{dueling_dqn_forward.1} parent=31 // pred_check
        %p1183 = pneg %p102
      $region34: #{dueling_dqn_forward.1} parent=31 // pred_check_branch
        %1185 = sbr.rel (%p1183) target = $region36
      $region35: #{dueling_dqn_forward.1} parent=31 // pred_region
        %s1186 = smul.u32 16, %s16
      $region36: #{dueling_dqn_forward.1} parent=31 // pred_fallthru
        _
      // Predicated region
      $region37: #{dueling_dqn_forward.1} parent=31 // pred_check
        %p1187 = pneg %p128
      $region38: #{dueling_dqn_forward.1} parent=31 // pred_check_branch
        %1189 = sbr.rel (%p1187) target = $region40
      $region39: #{dueling_dqn_forward.1} parent=31 // pred_region
        _
      $region40: #{dueling_dqn_forward.1} parent=31 // pred_fallthru
        _
    $region32: #{dueling_dqn_forward.1} parent=5 // pred_fallthru
      _
    %p1190 = scmp.le.s32.totalorder 2, %s11
    // Predicated region
    $region41: #{dueling_dqn_forward.1} parent=5 // pred_check
      %p1191 = pneg %p1190
    $region42: #{dueling_dqn_forward.1} parent=5 // pred_check_branch
      %1193 = sbr.rel (%p1191) target = $region44
    $region43: #{dueling_dqn_forward.1} parent=5 // pred_region
      %s1194 = ssub.s32 %s11, 2
      // Predicated region
      $region45: #{dueling_dqn_forward.1} parent=43 // pred_check
        %p1195 = pneg %p108
      $region46: #{dueling_dqn_forward.1} parent=43 // pred_check_branch
        %1197 = sbr.rel (%p1195) target = $region48
      $region47: #{dueling_dqn_forward.1} parent=43 // pred_region
        %s1198 = smul.u32 16, %s17
        %p1199 = scmp.lt.s32.totalorder %s1198, 31
        %s1200 = scalar_select %p1199, %s1198, 31
        %s1201 = smul.addr %s1200, 8
        %s1202 = scalar_lea.vmem %s3, %s1201
      $region48: #{dueling_dqn_forward.1} parent=43 // pred_fallthru
        _
      // Predicated region
      $region49: #{dueling_dqn_forward.1} parent=43 // pred_check
        %p1203 = pneg %p134
      $region50: #{dueling_dqn_forward.1} parent=43 // pred_check_branch
        %1205 = sbr.rel (%p1203) target = $region52
      $region51: #{dueling_dqn_forward.1} parent=43 // pred_region
        %p1206 = scmp.lt.s32.totalorder %s17, 1
        %s1207 = scalar_select %p1206, %s17, 1
        %s1208 = scalar_lea.vmem %s4, %s1207
      $region52: #{dueling_dqn_forward.1} parent=43 // pred_fallthru
        _
    $region44: #{dueling_dqn_forward.1} parent=5 // pred_fallthru
      _
  $region6: #{dueling_dqn_forward.1} parent=0 // loop_footer
    %s15 = sadd.s32 1, %s11
  $region7: #{dueling_dqn_forward.1} parent=0 // loop_footer_branch
    %10 = sbr.rel target = $region3
  $region8: #{dueling_dqn_forward.1} parent=0 // loop_exit
    _

</llo_original>
